<compile_context>
chip_gen: v5e
topology: v5e:2x2
jax: 0.10.0
libtpu: 0.0.40
codegen_flags: <defaults>
</compile_context>

<pallas_src>
import functools

import jax
import jax.numpy as jnp
from jax.experimental import pallas as pl
from jax.experimental.pallas import tpu as pltpu


# ---------------------------------------------------------------------------
# Single-step cell (matches LSTMCell.forward semantics).
# ---------------------------------------------------------------------------
def _lstm_cell_kernel(x_ref, h_ref, c_ref, wih_ref, whh_ref, b_ref,
                      h1_ref, c1_ref):
    H = c_ref.shape[1]
    # Two small MXU dots (no per-call [h,x] concat in the wrapper).
    gates = (
        jnp.dot(h_ref[...], whh_ref[...], preferred_element_type=jnp.float32)
        + jnp.dot(x_ref[...], wih_ref[...], preferred_element_type=jnp.float32)
        + b_ref[...]  # (1, 4H) broadcast
    )
    # torch.split(..., hidden_size, dim=1) -> f, i, o, g (in that order)
    f = gates[:, 0 * H:1 * H]
    i = gates[:, 1 * H:2 * H]
    o = gates[:, 2 * H:3 * H]
    g = gates[:, 3 * H:4 * H]

    c0 = c_ref[...].astype(jnp.float32)
    c1 = jax.nn.sigmoid(f) * c0 + jax.nn.sigmoid(i) * jnp.tanh(g)
    h1 = jax.nn.sigmoid(o) * jnp.tanh(c1)

    h1_ref[...] = h1.astype(h1_ref.dtype)
    c1_ref[...] = c1.astype(c1_ref.dtype)


def lstm_cell_forward(input_, h_0, c_0, weight_ih, weight_hh, bias):
    """Pallas LSTMCell forward (single step). Returns (h_1, c_1)."""
    B, _ = input_.shape
    H = h_0.shape[1]
    bias2d = bias.reshape(1, 4 * H)  # metadata-only reshape

    def full(shape):
        return pl.BlockSpec(shape, lambda: (0,) * len(shape),
                            memory_space=pltpu.MemorySpace.VMEM)

    h1, c1 = pl.pallas_call(
        _lstm_cell_kernel,
        out_shape=(jax.ShapeDtypeStruct((B, H), h_0.dtype),
                   jax.ShapeDtypeStruct((B, H), h_0.dtype)),
        in_specs=[full(input_.shape), full(h_0.shape), full(c_0.shape),
                  full(weight_ih.shape), full(weight_hh.shape),
                  full(bias2d.shape)],
        out_specs=(full((B, H)), full((B, H))),
    )(input_, h_0, c_0, weight_ih, weight_hh, bias2d)
    return h1, c1


# ---------------------------------------------------------------------------
# Fused multi-timestep scan: time loop inside the kernel, U steps per grid step.
# ---------------------------------------------------------------------------
def _lstm_scan_kernel(xproj_ref, whh_ref, h0_ref, c0_ref,
                      hseq_ref, hfin_ref, cfin_ref,
                      h_sc, c_sc, *, U, T, H):
    tb = pl.program_id(0)

    @pl.when(tb == 0)
    def _():
        # Initialize the f32 VMEM carries once; they stay resident all blocks.
        h_sc[...] = h0_ref[...].astype(jnp.float32)
        c_sc[...] = c0_ref[...].astype(jnp.float32)

    whh = whh_ref[...]          # resident weight (possibly bf16)
    h = h_sc[...]               # f32 carries held in vregs across the U steps
    c = c_sc[...]

    h_outs = []
    base = tb * U
    for u in range(U):          # fully unrolled in-trace (U is small & static)
        # Only the h-recurrence is serial; x @ W_ih + bias was hoisted outside
        # (xproj_ref already holds it for these U timesteps).
        gates = (
            jnp.dot(h.astype(whh.dtype), whh,
                    preferred_element_type=jnp.float32)
            + xproj_ref[u].astype(jnp.float32)
        )
        f = gates[:, 0 * H:1 * H]
        i = gates[:, 1 * H:2 * H]
        o = gates[:, 2 * H:3 * H]
        g = gates[:, 3 * H:4 * H]

        c1 = jax.nn.sigmoid(f) * c + jax.nn.sigmoid(i) * jnp.tanh(g)
        h1 = jax.nn.sigmoid(o) * jnp.tanh(c1)
        h_outs.append(h1)

        if T % U == 0:
            h, c = h1, c1
        else:
            # Tail block: steps past T must not advance the carries.
            valid = (base + u) < T
            h = jnp.where(valid, h1, h)
            c = jnp.where(valid, c1, c)

    h_sc[...] = h
    c_sc[...] = c
    # Single lane-dense (B, U*H) store per block for the h sequence.
    hseq_ref[0] = jnp.concatenate(h_outs, axis=1).astype(hseq_ref.dtype)

    @pl.when(tb == pl.num_programs(0) - 1)
    def _():
        hfin_ref[...] = h.astype(hfin_ref.dtype)   # f32 final state
        cfin_ref[...] = c.astype(cfin_ref.dtype)


def _vmem_bytes_estimate(U, B, H, seq_dtype, compute_dtype):
    cit = jnp.dtype(compute_dtype).itemsize
    oit = jnp.dtype(seq_dtype).itemsize
    xproj_blk = U * B * 4 * H * cit          # streamed, double-buffered
    hseq_blk = B * U * H * oit               # streamed out, double-buffered
    whh = H * 4 * H * cit                    # resident
    states = 4 * B * H * 4                   # h0/c0 inputs + f32 scratch
    fin = 2 * B * H * 4                      # final h/c outputs
    return 2 * xproj_blk + 2 * hseq_blk + whh + states + fin


def lstm_scan_forward(xs, h_0, c_0, weight_ih, weight_hh, bias, *,
                      steps_per_block=8, compute_dtype=jnp.float32):
    """Run LSTMCell recurrently over xs: (T, B, input_size).

    Returns (h_seq of shape (T, B, H), (h_T, c_T)); h_T/c_T are f32.
    compute_dtype: dtype of the MXU operands / streamed projection
      (use jnp.bfloat16 on v6e/v7x to halve the HBM stream and W_hh footprint;
      gating math and carries stay in f32).
    """
    T, B, In = xs.shape
    H = h_0.shape[1]
    U = max(1, min(steps_per_block, T))
    nblk = (T + U - 1) // U
    T_pad = nblk * U

    # Hoist the input projection out of the recurrence: one MXU-shaped
    # (T*B, In) x (In, 4H) matmul for all timesteps with the bias folded in.
    xproj = (xs.reshape(T * B, In) @ weight_ih
             + bias[None, :]).reshape(T, B, 4 * H)
    if T_pad != T:
        xproj = jnp.concatenate(
            [xproj, jnp.zeros((T_pad - T, B, 4 * H), xproj.dtype)], axis=0)
    xproj = xproj.astype(compute_dtype)          # halved stream when bf16
    whh = weight_hh.astype(compute_dtype)        # halved resident VMEM when bf16

    grid_spec = pltpu.PrefetchScalarGridSpec(
        num_scalar_prefetch=0,
        grid=(nblk,),
        in_specs=[
            # Streamed per block -> auto double-buffered behind the compute.
            pl.BlockSpec((U, B, 4 * H), lambda t: (t, 0, 0)),
            # Same block every step -> weight / initial state resident in VMEM.
            pl.BlockSpec((H, 4 * H), lambda t: (0, 0)),
            pl.BlockSpec((B, H), lambda t: (0, 0)),
            pl.BlockSpec((B, H), lambda t: (0, 0)),
        ],
        out_specs=[
            pl.BlockSpec((1, B, U * H), lambda t: (t, 0, 0)),  # packed h block
            pl.BlockSpec((B, H), lambda t: (0, 0)),            # final h (f32)
            pl.BlockSpec((B, H), lambda t: (0, 0)),            # final c (f32)
        ],
        scratch_shapes=[
            pltpu.VMEM((B, H), jnp.float32),   # h carry
            pltpu.VMEM((B, H), jnp.float32),   # c carry
        ],
    )

    # Raise the scoped VMEM limit only when the working set needs it
    # (defaults: 16 MiB v5e / 32 MiB v6e,v7x scoped; 64 MiB physical on v7x).
    est = _vmem_bytes_estimate(U, B, H, xs.dtype, compute_dtype)
    cp_kwargs = dict(dimension_semantics=("arbitrary",))  # time is sequential
    if est * 2 > 16 * 1024 * 1024:
        cp_kwargs["vmem_limit_bytes"] = int(min(est * 2, 48 * 1024 * 1024))

    kernel = functools.partial(_lstm_scan_kernel, U=U, T=T, H=H)
    h_packed, h_fin, c_fin = pl.pallas_call(
        kernel,
        out_shape=(
            jax.ShapeDtypeStruct((nblk, B, U * H), xs.dtype),
            jax.ShapeDtypeStruct((B, H), jnp.float32),
            jax.ShapeDtypeStruct((B, H), jnp.float32),
        ),
        grid_spec=grid_spec,
        compiler_params=pltpu.CompilerParams(**cp_kwargs),
    )(xproj, whh, h_0, c_0)

    # Unpack the lane-dense blocks back to (T, B, H): pure layout plumbing,
    # done once for the whole sequence.
    h_seq = (h_packed.reshape(nblk, B, U, H)
             .transpose(0, 2, 1, 3)
             .reshape(nblk * U, B, H))[:T]
    return h_seq, (h_fin, c_fin)


# ---------------------------------------------------------------------------
# Parameter init + pure-JAX references.
# ---------------------------------------------------------------------------
def init_lstm_params(input_size, hidden_size, forget_bias=1.0, seed=0):
    """Deterministic parameter init matching LSTMCell.reset_parameters()."""
    key = jax.random.PRNGKey(seed)
    wih = jax.nn.initializers.orthogonal()(
        key, (input_size, 4 * hidden_size), jnp.float32)
    eye = jnp.eye(hidden_size, dtype=jnp.float32)
    whh = jnp.tile(eye, (1, 4))
    bias = jnp.zeros((4 * hidden_size,), jnp.float32)
    bias = bias.at[:hidden_size].set(forget_bias)
    return wih, whh, bias


def lstm_cell_reference(input_, h_0, c_0, wih, whh, bias):
    H = h_0.shape[1]
    gates = h_0 @ whh + bias[None, :] + input_ @ wih
    f, i, o, g = (gates[:, k * H:(k + 1) * H] for k in range(4))
    c1 = jax.nn.sigmoid(f) * c_0 + jax.nn.sigmoid(i) * jnp.tanh(g)
    h1 = jax.nn.sigmoid(o) * jnp.tanh(c1)
    return h1, c1


def lstm_scan_reference(xs, h_0, c_0, wih, whh, bias):
    def step(carry, x):
        h, c = carry
        h1, c1 = lstm_cell_reference(x, h, c, wih, whh, bias)
        return (h1, c1), h1
    (hT, cT), h_seq = jax.lax.scan(step, (h_0, c_0), xs)
    return h_seq, (hT, cT)


if __name__ == "__main__":
    batch, input_size, hidden_size, seq_len = 8, 16, 32, 12

    wih, whh, bias = init_lstm_params(input_size, hidden_size, forget_bias=1.0)

    key = jax.random.PRNGKey(0)
    kx, kh, kc, ks = jax.random.split(key, 4)
    x = jax.random.normal(kx, (batch, input_size), jnp.float32)
    h0 = jax.random.normal(kh, (batch, hidden_size), jnp.float32)
    c0 = jax.random.normal(kc, (batch, hidden_size), jnp.float32)
    xs = jax.random.normal(ks, (seq_len, batch, input_size), jnp.float32)

    # Pure-JAX references.
    h1_ref, c1_ref = lstm_cell_reference(x, h0, c0, wih, whh, bias)
    h_seq_ref, (hT_ref, cT_ref) = lstm_scan_reference(xs, h0, c0, wih, whh, bias)

    # 1) Single-step cell (module forward semantics).
    h1, c1 = lstm_cell_forward(x, h0, c0, wih, whh, bias)
    jax.block_until_ready((h1, c1))
    assert jnp.allclose(h1, h1_ref, atol=1e-5, rtol=1e-5)
    assert jnp.allclose(c1, c1_ref, atol=1e-5, rtol=1e-5)

    # 2a) Fused scan, f32, U=8 (T=12 -> exercises the tail-masking path).
    h_seq, (hT, cT) = lstm_scan_forward(xs, h0, c0, wih, whh, bias,
                                        steps_per_block=8,
                                        compute_dtype=jnp.float32)
    jax.block_until_ready((h_seq, hT, cT))
    assert jnp.allclose(h_seq, h_seq_ref, atol=1e-4, rtol=1e-4)
    assert jnp.allclose(hT, hT_ref, atol=1e-4, rtol=1e-4)
    assert jnp.allclose(cT, cT_ref, atol=1e-4, rtol=1e-4)

    # 2b) Fused scan, f32, U=4 (exact block divide path).
    h_seq4, (hT4, cT4) = lstm_scan_forward(xs, h0, c0, wih, whh, bias,
                                           steps_per_block=4,
                                           compute_dtype=jnp.float32)
    jax.block_until_ready((h_seq4, hT4, cT4))
    assert jnp.allclose(h_seq4, h_seq_ref, atol=1e-4, rtol=1e-4)
    assert jnp.allclose(hT4, hT_ref, atol=1e-4, rtol=1e-4)
    assert jnp.allclose(cT4, cT_ref, atol=1e-4, rtol=1e-4)

    # 2c) Fused scan with bf16 MXU operands / bf16 xproj stream (v6e/v7x fast
    #     path).  Carries & gating stay f32; compare loosely against the f32 ref.
    h_seq_bf, (hT_bf, cT_bf) = lstm_scan_forward(xs, h0, c0, wih, whh, bias,
                                                 steps_per_block=8,
                                                 compute_dtype=jnp.bfloat16)
    jax.block_until_ready((h_seq_bf, hT_bf, cT_bf))
    assert jnp.allclose(h_seq_bf, h_seq_ref, atol=1e-1, rtol=1e-1)
    assert jnp.allclose(hT_bf, hT_ref, atol=1e-1, rtol=1e-1)
    assert jnp.allclose(cT_bf, cT_ref, atol=1e-1, rtol=1e-1)

    print("KERNEL_OK")
</pallas_src>

<mosaic_0001>
module attributes {stable_mosaic.version = 11 : i64} {
  func.func @_lstm_cell_kernel(%arg0: memref<8x16xf32, #tpu.memory_space<vmem>>, %arg1: memref<8x32xf32, #tpu.memory_space<vmem>>, %arg2: memref<8x32xf32, #tpu.memory_space<vmem>>, %arg3: memref<16x128xf32, #tpu.memory_space<vmem>>, %arg4: memref<32x128xf32, #tpu.memory_space<vmem>>, %arg5: memref<1x128xf32, #tpu.memory_space<vmem>>, %arg6: memref<8x32xf32, #tpu.memory_space<vmem>>, %arg7: memref<8x32xf32, #tpu.memory_space<vmem>>) attributes {dimension_semantics = [], scalar_prefetch = 0 : i64, scratch_operands = 0 : i64, tpu.core_type = #tpu.core_type<tc>} {
    %c0 = arith.constant 0 : index
    %c0_0 = arith.constant 0 : index
    %0 = vector.load %arg1[%c0, %c0_0] : memref<8x32xf32, #tpu.memory_space<vmem>>, vector<8x32xf32>
    %c0_1 = arith.constant 0 : index
    %c0_2 = arith.constant 0 : index
    %1 = vector.load %arg4[%c0_1, %c0_2] : memref<32x128xf32, #tpu.memory_space<vmem>>, vector<32x128xf32>
    %cst = arith.constant dense<0.000000e+00> : vector<8x128xf32>
    %2 = tpu.matmul %0, %1, %cst {dimension_numbers = #tpu.dot_dimension_numbers<[1], [0], [0], [1], [0, 0, 1, 1], [], []>} : vector<8x32xf32>, vector<32x128xf32>, vector<8x128xf32> -> vector<8x128xf32>
    %c0_3 = arith.constant 0 : index
    %c0_4 = arith.constant 0 : index
    %3 = vector.load %arg0[%c0_3, %c0_4] : memref<8x16xf32, #tpu.memory_space<vmem>>, vector<8x16xf32>
    %c0_5 = arith.constant 0 : index
    %c0_6 = arith.constant 0 : index
    %4 = vector.load %arg3[%c0_5, %c0_6] : memref<16x128xf32, #tpu.memory_space<vmem>>, vector<16x128xf32>
    %cst_7 = arith.constant dense<0.000000e+00> : vector<8x128xf32>
    %5 = tpu.matmul %3, %4, %cst_7 {dimension_numbers = #tpu.dot_dimension_numbers<[1], [0], [0], [1], [0, 0, 1, 1], [], []>} : vector<8x16xf32>, vector<16x128xf32>, vector<8x128xf32> -> vector<8x128xf32>
    %6 = arith.addf %2, %5 : vector<8x128xf32>
    %c0_8 = arith.constant 0 : index
    %c0_9 = arith.constant 0 : index
    %7 = vector.load %arg5[%c0_8, %c0_9] : memref<1x128xf32, #tpu.memory_space<vmem>>, vector<1x128xf32>
    %8 = vector.broadcast %7 : vector<1x128xf32> to vector<8x128xf32>
    %9 = arith.addf %6, %8 : vector<8x128xf32>
    %10 = vector.extract_strided_slice %9 {offsets = [0, 0], sizes = [8, 32], strides = [1, 1]} : vector<8x128xf32> to vector<8x32xf32>
    %11 = vector.extract_strided_slice %9 {offsets = [0, 32], sizes = [8, 32], strides = [1, 1]} : vector<8x128xf32> to vector<8x32xf32>
    %12 = vector.extract_strided_slice %9 {offsets = [0, 64], sizes = [8, 32], strides = [1, 1]} : vector<8x128xf32> to vector<8x32xf32>
    %13 = vector.extract_strided_slice %9 {offsets = [0, 96], sizes = [8, 32], strides = [1, 1]} : vector<8x128xf32> to vector<8x32xf32>
    %c0_10 = arith.constant 0 : index
    %c0_11 = arith.constant 0 : index
    %14 = vector.load %arg2[%c0_10, %c0_11] : memref<8x32xf32, #tpu.memory_space<vmem>>, vector<8x32xf32>
    %15 = arith.negf %10 : vector<8x32xf32>
    %16 = math.exp %15 : vector<8x32xf32>
    %cst_12 = arith.constant 1.000000e+00 : f32
    %17 = vector.broadcast %cst_12 : f32 to vector<8x32xf32>
    %18 = arith.addf %17, %16 : vector<8x32xf32>
    %19 = arith.divf %17, %18 : vector<8x32xf32>
    %20 = arith.mulf %19, %14 : vector<8x32xf32>
    %21 = arith.negf %11 : vector<8x32xf32>
    %22 = math.exp %21 : vector<8x32xf32>
    %cst_13 = arith.constant 1.000000e+00 : f32
    %23 = vector.broadcast %cst_13 : f32 to vector<8x32xf32>
    %24 = arith.addf %23, %22 : vector<8x32xf32>
    %25 = arith.divf %23, %24 : vector<8x32xf32>
    %26 = math.tanh %13 : vector<8x32xf32>
    %27 = arith.mulf %25, %26 : vector<8x32xf32>
    %28 = arith.addf %20, %27 : vector<8x32xf32>
    %29 = arith.negf %12 : vector<8x32xf32>
    %30 = math.exp %29 : vector<8x32xf32>
    %cst_14 = arith.constant 1.000000e+00 : f32
    %31 = vector.broadcast %cst_14 : f32 to vector<8x32xf32>
    %32 = arith.addf %31, %30 : vector<8x32xf32>
    %33 = arith.divf %31, %32 : vector<8x32xf32>
    %34 = math.tanh %28 : vector<8x32xf32>
    %35 = arith.mulf %33, %34 : vector<8x32xf32>
    %c0_15 = arith.constant 0 : index
    %c0_16 = arith.constant 0 : index
    %36 = vector.load %arg6[%c0_15, %c0_16] : memref<8x32xf32, #tpu.memory_space<vmem>>, vector<8x32xf32>
    tpu.vector_store %arg6[%c0_15, %c0_16], %35 {strides = array<i32>} : memref<8x32xf32, #tpu.memory_space<vmem>>, vector<8x32xf32>,
    %c0_17 = arith.constant 0 : index
    %c0_18 = arith.constant 0 : index
    %37 = vector.load %arg7[%c0_17, %c0_18] : memref<8x32xf32, #tpu.memory_space<vmem>>, vector<8x32xf32>
    tpu.vector_store %arg7[%c0_17, %c0_18], %28 {strides = array<i32>} : memref<8x32xf32, #tpu.memory_space<vmem>>, vector<8x32xf32>,
    return
  }
}

</mosaic_0001>

<llo_original>
// kernel: tpu_custom_call.1
$region0: #{tpu_custom_call.1}
  #allocation0 [shape = 'u32[]', space=smem, size = 0x4, offset = 0x4, fixed_abs, tag = 'smem constant byte address 0x4 - core index']
  #allocation1 [shape = 'u32[72,128]{1,0:T(1,128)}', space=vmem, size = 0x9000, scoped, tag = 'internal scratch']
  %s0 = inlined_call_operand.hbm [shape: f32[8,16], index: 0, kind: input, shape index: {}]
  %s1 = inlined_call_operand.hbm [shape: f32[8,32], index: 1, kind: input, shape index: {}]
  %s2 = inlined_call_operand.hbm [shape: f32[8,32], index: 2, kind: input, shape index: {}]
  %s3 = inlined_call_operand.hbm [shape: f32[16,128], index: 3, kind: input, shape index: {}]
  %s4 = inlined_call_operand.hbm [shape: f32[32,128], index: 4, kind: input, shape index: {}]
  %s5 = inlined_call_operand.vmem [shape: f32[1,128], index: 5, kind: input, shape index: {}]
  %s6 = inlined_call_operand.hbm [shape: f32[8,32], index: 6, kind: output, shape index: {0}]
  %s7 = inlined_call_operand.hbm [shape: f32[8,32], index: 7, kind: output, shape index: {1}]
  %8 = xla_tuple %s6, %s7
  %s9 = sld [smem:[#allocation0]]
  $region62: #{tpu_custom_call.1} parent=0
    _
  %s11 = ssub.s32 1, %s9
  %s12 = scalar_select 0, %s11, %s9
  $region1: #{tpu_custom_call.1} parent=0
    #allocation2 [shape = 'u8[4096]{0}', space=vmem, size = 0x1000, scoped, tag = 'input window, operand 0, single buffered']
    #allocation3 [shape = 's32[1]{0}', space=sflag, size = 0x4, scoped, tag = 'scoped memory for tpu_custom_call.1']
    #allocation4 [shape = 's32[1]{0}', space=sflag, size = 0x4, scoped, tag = 'scoped memory for tpu_custom_call.1']
    #allocation5 [shape = 'u8[4096]{0}', space=vmem, size = 0x1000, scoped, tag = 'input window, operand 1, single buffered']
    #allocation6 [shape = 's32[1]{0}', space=sflag, size = 0x4, scoped, tag = 'scoped memory for tpu_custom_call.1']
    #allocation7 [shape = 'u8[4096]{0}', space=vmem, size = 0x1000, scoped, tag = 'input window, operand 2, single buffered']
    #allocation8 [shape = 'u8[8192]{0}', space=vmem, size = 0x2000, scoped, tag = 'input window, operand 3, single buffered']
    #allocation9 [shape = 's32[1]{0}', space=sflag, size = 0x4, scoped, tag = 'scoped memory for tpu_custom_call.1']
    #allocation10 [shape = 'u8[16384]{0}', space=vmem, size = 0x4000, scoped, tag = 'input window, operand 4, single buffered']
    #allocation11 [shape = 'u8[4096]{0}', space=vmem, size = 0x1000, scoped, tag = 'output window, operand 0, single buffered']
    #allocation12 [shape = 'u8[4096]{0}', space=vmem, size = 0x1000, scoped, tag = 'output window, operand 1, single buffered']
    #allocation13 [shape = 's32[1]{0}', space=sflag, size = 0x4, scoped, tag = 'scoped memory for tpu_custom_call.1']
    %13 = vsyncpa [#allocation3], 0
    %14 = vsyncpa [#allocation6], 0
    %15 = vsyncpa [#allocation9], 0
    %16 = vsyncpa [#allocation4], 0
    %17 = vsyncpa [#allocation13], 0
    // Predicated region
    $region2: #{tpu_custom_call.1} parent=1 // pred_check
      _
    $region3: #{tpu_custom_call.1} parent=1 // pred_check_branch
      %19 = sbr.rel (0) target = $region5
    $region4: #{tpu_custom_call.1} parent=1 // pred_region
      %21 = vsyncadd [#allocation3], 0
      %s23 = sshll.u32 %s0, 4
      %s24 = int_to_ptr.hbm [resolvable:$true] %s23
      %s25 = sshll.u32 [#allocation2], 4
      %s26 = int_to_ptr.vmem [resolvable:$true] %s25
      %28 = dma.hbm_to_vmem [thread:$0]  %s24, 128, %s26, [#allocation3]
    $region5: #{tpu_custom_call.1} parent=1 // pred_fallthru
      _
    // Predicated region
    $region6: #{tpu_custom_call.1} parent=1 // pred_check
      _
    $region7: #{tpu_custom_call.1} parent=1 // pred_check_branch
      %30 = sbr.rel (0) target = $region9
    $region8: #{tpu_custom_call.1} parent=1 // pred_region
      %32 = vsyncadd [#allocation6], 0
      %s34 = sshll.u32 %s1, 4
      %s35 = int_to_ptr.hbm [resolvable:$true] %s34
      %s36 = sshll.u32 [#allocation5], 4
      %s37 = int_to_ptr.vmem [resolvable:$true] %s36
      %39 = dma.hbm_to_vmem [thread:$0]  %s35, 128, %s37, [#allocation6]
    $region9: #{tpu_custom_call.1} parent=1 // pred_fallthru
      _
    // Predicated region
    $region10: #{tpu_custom_call.1} parent=1 // pred_check
      _
    $region11: #{tpu_custom_call.1} parent=1 // pred_check_branch
      %41 = sbr.rel (0) target = $region13
    $region12: #{tpu_custom_call.1} parent=1 // pred_region
      %43 = vsyncadd [#allocation6], 0
      %s45 = sshll.u32 %s2, 4
      %s46 = int_to_ptr.hbm [resolvable:$true] %s45
      %s47 = sshll.u32 [#allocation7], 4
      %s48 = int_to_ptr.vmem [resolvable:$true] %s47
      %50 = dma.hbm_to_vmem [thread:$0]  %s46, 128, %s48, [#allocation6]
    $region13: #{tpu_custom_call.1} parent=1 // pred_fallthru
      _
    // Predicated region
    $region14: #{tpu_custom_call.1} parent=1 // pred_check
      _
    $region15: #{tpu_custom_call.1} parent=1 // pred_check_branch
      %52 = sbr.rel (0) target = $region17
    $region16: #{tpu_custom_call.1} parent=1 // pred_region
      %54 = vsyncadd [#allocation9], 0
      %s55 = sshll.u32 %s3, 4
      %s56 = int_to_ptr.hbm [resolvable:$true] %s55
      %s57 = sshll.u32 [#allocation8], 4
      %s58 = int_to_ptr.vmem [resolvable:$true] %s57
      %63 = dma.hbm_to_vmem [thread:$0]  %s56, 256, %s58, [#allocation9], 128, 128, 8
    $region17: #{tpu_custom_call.1} parent=1 // pred_fallthru
      _
    // Predicated region
    $region18: #{tpu_custom_call.1} parent=1 // pred_check
      _
    $region19: #{tpu_custom_call.1} parent=1 // pred_check_branch
      %65 = sbr.rel (0) target = $region21
    $region20: #{tpu_custom_call.1} parent=1 // pred_region
      %67 = vsyncadd [#allocation9], 0
      %s68 = sshll.u32 %s4, 4
      %s69 = int_to_ptr.hbm [resolvable:$true] %s68
      %s70 = sshll.u32 [#allocation10], 4
      %s71 = int_to_ptr.vmem [resolvable:$true] %s70
      %76 = dma.hbm_to_vmem [thread:$0]  %s69, 512, %s71, [#allocation9], 128, 128, 8
    $region21: #{tpu_custom_call.1} parent=1 // pred_fallthru
      _
    // Predicated region
    $region22: #{tpu_custom_call.1} parent=1 // pred_check
      _
    $region23: #{tpu_custom_call.1} parent=1 // pred_check_branch
      %78 = sbr.rel (0) target = $region25
    $region24: #{tpu_custom_call.1} parent=1 // pred_region
      _
    $region25: #{tpu_custom_call.1} parent=1 // pred_fallthru
      _
    // Predicated region
    $region26: #{tpu_custom_call.1} parent=1 // pred_check
      _
    $region27: #{tpu_custom_call.1} parent=1 // pred_check_branch
      %80 = sbr.rel (0) target = $region29
    $region28: #{tpu_custom_call.1} parent=1 // pred_region
      %82 = dma.done [#allocation3], 128
    $region29: #{tpu_custom_call.1} parent=1 // pred_fallthru
      _
    // Predicated region
    $region30: #{tpu_custom_call.1} parent=1 // pred_check
      _
    $region31: #{tpu_custom_call.1} parent=1 // pred_check_branch
      %84 = sbr.rel (0) target = $region33
    $region32: #{tpu_custom_call.1} parent=1 // pred_region
      %86 = dma.done [#allocation6], 128
    $region33: #{tpu_custom_call.1} parent=1 // pred_fallthru
      _
    // Predicated region
    $region34: #{tpu_custom_call.1} parent=1 // pred_check
      _
    $region35: #{tpu_custom_call.1} parent=1 // pred_check_branch
      %88 = sbr.rel (0) target = $region37
    $region36: #{tpu_custom_call.1} parent=1 // pred_region
      %90 = dma.done [#allocation6], 128
    $region37: #{tpu_custom_call.1} parent=1 // pred_fallthru
      _
    // Predicated region
    $region38: #{tpu_custom_call.1} parent=1 // pred_check
      _
    $region39: #{tpu_custom_call.1} parent=1 // pred_check_branch
      %92 = sbr.rel (0) target = $region41
    $region40: #{tpu_custom_call.1} parent=1 // pred_region
      %94 = dma.done [#allocation9], 256
    $region41: #{tpu_custom_call.1} parent=1 // pred_fallthru
      _
    // Predicated region
    $region42: #{tpu_custom_call.1} parent=1 // pred_check
      _
    $region43: #{tpu_custom_call.1} parent=1 // pred_check_branch
      %96 = sbr.rel (0) target = $region45
    $region44: #{tpu_custom_call.1} parent=1 // pred_region
      %98 = dma.done [#allocation9], 512
    $region45: #{tpu_custom_call.1} parent=1 // pred_fallthru
      _
    %v99 = vld [vmem:[#allocation5] sm:$0xff]
    %v100 = vld [vmem:[#allocation10] sm:$0xff]
    %v101 = vld [vmem:[#allocation10 + $0x8] sm:$0xff]
    %v102 = vld [vmem:[#allocation10 + $0x10] sm:$0xff]
    %v103 = vld [vmem:[#allocation10 + $0x18] sm:$0xff]
    %v104 = vld [vmem:[#allocation2] sm:$0xff]
    %v105 = vld [vmem:[#allocation8] sm:$0xff]
    %v106 = vld [vmem:[#allocation8 + $0x8] sm:$0xff]
    %vm107 = vcmask 130048
    %v109 = vsel %vm107, %v104, 0
    %111 = vmatpush.msra.mxu0 0.0
    %112 = vmatpush.msra.mxu0 0.0
    %113 = vmatpush.msra.mxu0 0.0
    %114 = vmatpush.msra.mxu0 0.0
    %115 = vmatpush.msra.mxu0 0.0
    %116 = vmatpush.msra.mxu0 0.0
    %117 = vmatpush.msra.mxu0 0.0
    %118 = vmatpush.msra.mxu0 0.0
    %119 = vmatpush.msra.mxu0 0.0
    %120 = vmatpush.msra.mxu0 0.0
    %121 = vmatpush.msra.mxu0 0.0
    %122 = vmatpush.msra.mxu0 0.0
    %123 = vmatpush.msra.mxu0 0.0
    %124 = vmatpush.msra.mxu0 0.0
    %125 = vmatpush.msra.mxu0 %v106
    %126 = vmatpush.msra.mxu0 %v105
    %127 = vmatmul.f32.gmra.mxu0 %v109
    %v128 = vpop.f32.mrf.mxu0
    %v129 = vadd.f32 0.0, %v128
    %130 = vdwg.mxu0
    %vm131 = vcmask 261120
    %v133 = vsel %vm131, %v99, 0
    %135 = vmatpush.msra.mxu0 0.0
    %136 = vmatpush.msra.mxu0 0.0
    %137 = vmatpush.msra.mxu0 0.0
    %138 = vmatpush.msra.mxu0 0.0
    %139 = vmatpush.msra.mxu0 0.0
    %140 = vmatpush.msra.mxu0 0.0
    %141 = vmatpush.msra.mxu0 0.0
    %142 = vmatpush.msra.mxu0 0.0
    %143 = vmatpush.msra.mxu0 0.0
    %144 = vmatpush.msra.mxu0 0.0
    %145 = vmatpush.msra.mxu0 0.0
    %146 = vmatpush.msra.mxu0 0.0
    %147 = vmatpush.msra.mxu0 %v103
    %148 = vmatpush.msra.mxu0 %v102
    %149 = vmatpush.msra.mxu0 %v101
    %150 = vmatpush.msra.mxu0 %v100
    %151 = vmatmul.f32.gmra.mxu0 %v133
    %v152 = vpop.f32.mrf.mxu0
    %v153 = vadd.f32 %v129, %v152
    %154 = vdwg.mxu0
    %v155 = vld [vmem:[%s5] sm:$0x1]
    %v157 = vperm.slane %v155, 0
    %v159 = vadd.f32 %v153, %v157
    %v160 = vld [vmem:[#allocation7] sm:$0xff]
    %v161 = vxor.u32 %v159, 2147483648
    %v162 = vmul.f32 %v161, 1.442695
    %v163 = vpow.pop %v162
    %v164 = vadd.f32 %v163, 1.0
    %v165 = vrcp.pop %v164
    %v166 = vmul.f32 %v164, %v165
    %v167 = vsub.f32 1.0, %v166
    %v168 = vmul.f32 %v165, %v167
    %v169 = vadd.f32 %v165, %v168
    %vm170 = vweird.f32 %v164
    %vm171 = vweird.f32 %v165
    %vm172 = vmor %vm170, %vm171
    %v173 = vsel %vm172, %v165, %v169
    %v174 = vand.u32 2147483647, %v164
    %vm175 = vcmp.eq.f32.partialorder %v174, 8.507059e+37
    %v176 = vand.u32 %v164, 2147483648
    %v177 = vor.u32 1.1754944e-38, %v176
    %v178 = vsel %vm175, %v177, %v173
    %v179 = vmul.f32 1.0, %v178
    %v180 = vmul.f32 %v179, %v160
    %v181 = vtanh.pop %v159
    %183 = vrot.lane.b32.xlu0 %v181, 64
    %v184 = vpop.permute.xlu0 %183
    %v186 = vmul.f32 %v179, %v184
    %188 = vrot.lane.b32.xlu0 %v186, 96
    %v189 = vpop.permute.xlu0 %188
    %v191 = vadd.f32 %v180, %v189
    %v192 = vtanh.pop %v191
    %194 = vrot.lane.b32.xlu0 %v192, 64
    %v195 = vpop.permute.xlu0 %194
    %v197 = vmul.f32 %v179, %v195
    %199 = vrot.lane.b32.xlu0 %v197, 64
    %v200 = vpop.permute.xlu0 %199
    %202 = vst.msk [vmem:[#allocation11] sm:$0xff] %vm131, %v200
    %203 = vst.msk [vmem:[#allocation12] sm:$0xff] %vm131, %v191
    // Predicated region
    $region46: #{tpu_custom_call.1} parent=1 // pred_check
      _
    $region47: #{tpu_custom_call.1} parent=1 // pred_check_branch
      %205 = sbr.rel (0) target = $region49
    $region48: #{tpu_custom_call.1} parent=1 // pred_region
      %207 = vsyncadd [#allocation4], 0
      %s209 = sshll.u32 [#allocation11], 4
      %s210 = int_to_ptr.vmem [resolvable:$true] %s209
      %s211 = sshll.u32 %s6, 4
      %s212 = int_to_ptr.hbm [resolvable:$true] %s211
      %214 = dma.vmem_to_hbm [thread:$0]  %s210, 128, %s212, [#allocation4]
    $region49: #{tpu_custom_call.1} parent=1 // pred_fallthru
      _
    // Predicated region
    $region50: #{tpu_custom_call.1} parent=1 // pred_check
      _
    $region51: #{tpu_custom_call.1} parent=1 // pred_check_branch
      %216 = sbr.rel (0) target = $region53
    $region52: #{tpu_custom_call.1} parent=1 // pred_region
      %218 = vsyncadd [#allocation13], 0
      %s220 = sshll.u32 [#allocation12], 4
      %s221 = int_to_ptr.vmem [resolvable:$true] %s220
      %s222 = sshll.u32 %s7, 4
      %s223 = int_to_ptr.hbm [resolvable:$true] %s222
      %225 = dma.vmem_to_hbm [thread:$0]  %s221, 128, %s223, [#allocation13]
    $region53: #{tpu_custom_call.1} parent=1 // pred_fallthru
      _
    // Predicated region
    $region54: #{tpu_custom_call.1} parent=1 // pred_check
      _
    $region55: #{tpu_custom_call.1} parent=1 // pred_check_branch
      %227 = sbr.rel (0) target = $region57
    $region56: #{tpu_custom_call.1} parent=1 // pred_region
      %229 = dma.done [#allocation4], 128
    $region57: #{tpu_custom_call.1} parent=1 // pred_fallthru
      _
    // Predicated region
    $region58: #{tpu_custom_call.1} parent=1 // pred_check
      _
    $region59: #{tpu_custom_call.1} parent=1 // pred_check_branch
      %231 = sbr.rel (0) target = $region61
    $region60: #{tpu_custom_call.1} parent=1 // pred_region
      %233 = dma.done [#allocation13], 128
    $region61: #{tpu_custom_call.1} parent=1 // pred_fallthru
      _
    %234 = vsyncpa [#allocation3], 1
    %235 = vsyncpa [#allocation6], 1
    %236 = vsyncpa [#allocation9], 1
    %237 = vsyncpa [#allocation4], 1
    %238 = vsyncpa [#allocation13], 1

</llo_original>
